<compile_context>
chip_gen: v5e
topology: v5e:2x2
jax: 0.10.0
libtpu: 0.0.40
codegen_flags: <defaults>
</compile_context>

<pallas_src>
import jax
import jax.numpy as jnp
from jax.experimental import pallas as pl
from jax.experimental.pallas import tpu as pltpu


def _binary_activation_kernel(x_ref, o_ref):
    # Forward value of the STE expression == sign(x).  Two compares + two
    # selects in the input dtype (no converts, no transcendentals).
    x = x_ref[...]
    one = jnp.ones((), dtype=x.dtype)
    zero = jnp.zeros((), dtype=x.dtype)
    sgn = jnp.where(x > zero, one, jnp.where(x < zero, -one, zero))
    o_ref[...] = sgn.astype(o_ref.dtype)


def binary_activation(x, *, rows_block=2048):
    """Elementwise BinaryActivation forward for an arbitrary-shaped x.

    rows_block: row extent of one block (multiple of 8).  2048 rows x 512
    lanes x f32 = 4 MiB/block; bump to 4096 on v7x if desired (feedback: ~8
    MiB blocks shave the per-step overhead further, still < 48 MiB VMEM).
    """
    orig_shape = x.shape
    orig_dtype = x.dtype
    n = int(x.size)
    if n == 0:
        return x

    # Lane-dense last dim that exactly divides n -> zero-copy reshape, no pad.
    lane = None
    for cand in (512, 256, 128):
        if n % cand == 0:
            lane = cand
            break

    pad = 0
    if lane is None:
        # TODO(synk): ragged tail (<128 elems) handled with a minimal pad; a
        # masked-epilogue kernel would avoid this extra copy entirely.
        lane = 128
        pad = (-n) % lane

    flat = x.reshape(-1)
    if pad:
        flat = jnp.pad(flat, (0, pad))
    rows = (n + pad) // lane
    x2d = flat.reshape(rows, lane)

    # Row block: multiple of 8 (or the full extent when rows < 16), and at
    # least 2 grid steps whenever possible (two-TC sharding + pipelining).
    if rows < 16:
        rows_blk = rows
    else:
        rows_blk = max(8, min(rows_block, (rows // 2) // 8 * 8))
    grid = (pl.cdiv(rows, rows_blk),)

    out2d = pl.pallas_call(
        _binary_activation_kernel,
        out_shape=jax.ShapeDtypeStruct((rows, lane), orig_dtype),
        grid_spec=pltpu.PrefetchScalarGridSpec(
            num_scalar_prefetch=0,
            grid=grid,
            in_specs=[pl.BlockSpec((rows_blk, lane), lambda i: (i, 0))],
            out_specs=pl.BlockSpec((rows_blk, lane), lambda i: (i, 0)),
        ),
        compiler_params=pltpu.CompilerParams(
            dimension_semantics=("parallel",),
            vmem_limit_bytes=48 << 20,
        ),
    )(x2d)

    out_flat = out2d.reshape(-1)
    if pad:
        out_flat = out_flat[:n]
    return out_flat.reshape(orig_shape)


def _binary_activation_ref(x):
    """Plain-JAX reference mirroring the PyTorch formula exactly."""
    xf = x.astype(jnp.float32)
    out_forward = jnp.sign(xf)
    m1 = (xf < -1.0).astype(jnp.float32)
    m2 = (xf < 0.0).astype(jnp.float32)
    m3 = (xf < 1.0).astype(jnp.float32)
    out1 = -1.0 * m1 + (xf * xf + 2.0 * xf) * (1.0 - m1)
    out2 = out1 * m2 + (-xf * xf + 2.0 * xf) * (1.0 - m2)
    out3 = out2 * m3 + 1.0 * (1.0 - m3)
    return (out_forward - out3 + out3).astype(x.dtype)


if __name__ == "__main__":
    key = jax.random.PRNGKey(0)

    # Small 4-D activation tensor (batch, channels, H, W); values span
    # roughly [-3, 3] so all piecewise branches (< -1, < 0, < 1, >= 1) hit.
    B, C, H, W = 2, 4, 16, 16
    x = jax.random.normal(key, (B, C, H, W), dtype=jnp.float32) * 1.5

    out = binary_activation(x)
    out = jax.block_until_ready(out)

    ref = _binary_activation_ref(x)
    assert out.shape == x.shape
    assert out.dtype == x.dtype
    # Kernel returns exact sign(x); the reference's (sign - out3) + out3 can
    # differ by ~1 ulp near branch points, hence the small tolerance.
    assert jnp.allclose(out, ref, atol=2e-6), "mismatch vs reference"

    print("KERNEL_OK")
</pallas_src>

<mosaic_0001>
module attributes {stable_mosaic.version = 11 : i64} {
  func.func @_binary_activation_kernel(%arg0: i32, %arg1: memref<4x512xf32, #tpu.memory_space<vmem>>, %arg2: memref<4x512xf32, #tpu.memory_space<vmem>>) attributes {dimension_semantics = [#tpu.dimension_semantics<parallel>], iteration_bounds = array<i64: 1>, scalar_prefetch = 0 : i64, scratch_operands = 0 : i64, tpu.core_type = #tpu.core_type<tc>, window_params = [{transform_indices = @transform_0, window_bounds = array<i64: 4, 512>}, {transform_indices = @transform_1, window_bounds = array<i64: 4, 512>}]} {
    %c0 = arith.constant 0 : index
    %c0_0 = arith.constant 0 : index
    %0 = vector.load %arg1[%c0, %c0_0] : memref<4x512xf32, #tpu.memory_space<vmem>>, vector<4x512xf32>
    %cst = arith.constant 0.000000e+00 : f32
    %1 = vector.broadcast %cst : f32 to vector<4x512xf32>
    %2 = arith.cmpf ogt, %0, %1 : vector<4x512xf32>
    %cst_1 = arith.constant 0.000000e+00 : f32
    %3 = vector.broadcast %cst_1 : f32 to vector<4x512xf32>
    %4 = arith.cmpf olt, %0, %3 : vector<4x512xf32>
    %cst_2 = arith.constant 0.000000e+00 : f32
    %cst_3 = arith.constant 1.000000e+00 : f32
    %5 = arith.subf %cst_2, %cst_3 : f32
    %cst_4 = arith.constant 0.000000e+00 : f32
    %6 = vector.broadcast %5 : f32 to vector<4x512xf32>
    %7 = vector.broadcast %cst_4 : f32 to vector<4x512xf32>
    %8 = arith.select %4, %6, %7 : vector<4x512xi1>, vector<4x512xf32>
    %cst_5 = arith.constant 1.000000e+00 : f32
    %9 = vector.broadcast %cst_5 : f32 to vector<4x512xf32>
    %10 = arith.select %2, %9, %8 : vector<4x512xi1>, vector<4x512xf32>
    %c0_6 = arith.constant 0 : index
    %c0_7 = arith.constant 0 : index
    %11 = vector.load %arg2[%c0_6, %c0_7] : memref<4x512xf32, #tpu.memory_space<vmem>>, vector<4x512xf32>
    tpu.vector_store %arg2[%c0_6, %c0_7], %10 {strides = array<i32>} : memref<4x512xf32, #tpu.memory_space<vmem>>, vector<4x512xf32>,
    return
  }
  func.func @transform_0(%arg0: i32) -> (i32, i32) {
    %c0_i32 = arith.constant 0 : i32
    %c0_i32_0 = arith.constant 0 : i32
    return %arg0, %c0_i32 : i32, i32
  }
  func.func @transform_1(%arg0: i32) -> (i32, i32) {
    %c0_i32 = arith.constant 0 : i32
    %c0_i32_0 = arith.constant 0 : i32
    return %arg0, %c0_i32 : i32, i32
  }
}

</mosaic_0001>

<llo_original>
// kernel: tpu_custom_call.1
$region0: #{tpu_custom_call.1}
  #allocation0 [shape = 'u32[]', space=smem, size = 0x4, offset = 0x4, fixed_abs, tag = 'smem constant byte address 0x4 - core index']
  #allocation1 [shape = 'u32[72,128]{1,0:T(1,128)}', space=vmem, size = 0x9000, scoped, tag = 'internal scratch']
  %s0 = inlined_call_operand.hbm [shape: f32[4,512], index: 0, kind: input, shape index: {}]
  %s1 = inlined_call_operand.hbm [shape: f32[4,512], index: 1, kind: output, shape index: {}]
  %s2 = sld [smem:[#allocation0]]
  $region18: #{tpu_custom_call.1} parent=0
    _
  %s4 = ssub.s32 1, %s2
  %s5 = scalar_select 0, %s4, %s2
  $region1: #{tpu_custom_call.1} parent=0
    #allocation2 [shape = 'u8[8192]{0}', space=vmem, size = 0x2000, scoped, tag = 'input window, operand 0, single buffered']
    #allocation3 [shape = 's32[1]{0}', space=sflag, size = 0x4, scoped, tag = 'scoped memory for tpu_custom_call.1']
    #allocation4 [shape = 's32[1]{0}', space=sflag, size = 0x4, scoped, tag = 'scoped memory for tpu_custom_call.1']
    #allocation5 [shape = 'u8[8192]{0}', space=vmem, size = 0x2000, scoped, tag = 'output window, operand 0, single buffered']
    %6 = vsyncpa [#allocation3], 0
    %7 = vsyncpa [#allocation4], 0
    // Predicated region
    $region2: #{tpu_custom_call.1} parent=1 // pred_check
      _
    $region3: #{tpu_custom_call.1} parent=1 // pred_check_branch
      %9 = sbr.rel (0) target = $region5
    $region4: #{tpu_custom_call.1} parent=1 // pred_region
      %11 = vsyncadd [#allocation3], 0
      %s13 = sshll.u32 %s0, 4
      %s14 = int_to_ptr.hbm [resolvable:$true] %s13
      %s15 = sshll.u32 [#allocation2], 4
      %s16 = int_to_ptr.vmem [resolvable:$true] %s15
      %18 = dma.hbm_to_vmem [thread:$0]  %s14, 256, %s16, [#allocation3]
    $region5: #{tpu_custom_call.1} parent=1 // pred_fallthru
      _
    // Predicated region
    $region6: #{tpu_custom_call.1} parent=1 // pred_check
      _
    $region7: #{tpu_custom_call.1} parent=1 // pred_check_branch
      %20 = sbr.rel (0) target = $region9
    $region8: #{tpu_custom_call.1} parent=1 // pred_region
      %22 = dma.done [#allocation3], 256
    $region9: #{tpu_custom_call.1} parent=1 // pred_fallthru
      _
    %v23 = vld [vmem:[#allocation2] sm:$0xff]
    %v24 = vld [vmem:[#allocation2 + $0x8] sm:$0xff]
    %vm25 = vcmp.gt.f32.partialorder %v23, 0.0
    %vm26 = vcmp.gt.f32.partialorder %v24, 0.0
    %vm27 = vcmp.lt.f32.partialorder %v23, 0.0
    %vm28 = vcmp.lt.f32.partialorder %v24, 0.0
    %v29 = vsel %vm27, -1.0, 0.0
    %v30 = vsel %vm28, -1.0, 0.0
    %v31 = vsel %vm25, 1.0, %v29
    %v32 = vsel %vm26, 1.0, %v30
    %33 = vst [vmem:[#allocation5] sm:$0xff] %v31
    %34 = vst [vmem:[#allocation5 + $0x8] sm:$0xff] %v32
    // Predicated region
    $region10: #{tpu_custom_call.1} parent=1 // pred_check
      _
    $region11: #{tpu_custom_call.1} parent=1 // pred_check_branch
      %36 = sbr.rel (0) target = $region13
    $region12: #{tpu_custom_call.1} parent=1 // pred_region
      %38 = vsyncadd [#allocation4], 0
      %s40 = sshll.u32 [#allocation5], 4
      %s41 = int_to_ptr.vmem [resolvable:$true] %s40
      %s42 = sshll.u32 %s1, 4
      %s43 = int_to_ptr.hbm [resolvable:$true] %s42
      %45 = dma.vmem_to_hbm [thread:$0]  %s41, 256, %s43, [#allocation4]
    $region13: #{tpu_custom_call.1} parent=1 // pred_fallthru
      _
    // Predicated region
    $region14: #{tpu_custom_call.1} parent=1 // pred_check
      _
    $region15: #{tpu_custom_call.1} parent=1 // pred_check_branch
      %47 = sbr.rel (0) target = $region17
    $region16: #{tpu_custom_call.1} parent=1 // pred_region
      %49 = dma.done [#allocation4], 256
    $region17: #{tpu_custom_call.1} parent=1 // pred_fallthru
      _
    %50 = vsyncpa [#allocation3], 1
    %51 = vsyncpa [#allocation4], 1

</llo_original>
